<compile_context>
chip_gen: v7x
topology: tpu7x:2x2x1
jax: 0.10.0
libtpu: 0.0.40
codegen_flags: <defaults>
</compile_context>

<pallas_src>
import math

import jax
import jax.numpy as jnp
import numpy as np
from jax.experimental import pallas as pl
from jax.experimental.pallas import tpu as pltpu


def _round_up(x, m):
    return (x + m - 1) // m * m


def _lcm(a, b):
    return a * b // math.gcd(a, b)


def _vmem_limit_bytes():
    """Generation-aware scoped-VMEM limit (v5e/v6e -> ~96 MiB, v7x -> 48 MiB)."""
    try:
        cap = pltpu.get_tpu_info().vmem_capacity_bytes
        return int(min(cap * 3 // 4, 100 * 1024 * 1024))
    except Exception:
        return 48 * 1024 * 1024  # safe on every generation (v7x has 64 MiB physical)


def _finalize_stats(partials, inv_cnt, eps):
    """Combine per-block (sum, sumsq) partials into per-channel (mean, rstd)."""
    # NOTE: single-pass E[x^2] - mean^2 in f32; adequate for roughly centered
    # activations, would need Welford/two-pass for badly conditioned data.
    tot = jnp.sum(partials, axis=0)                      # (2, C)
    mean = tot[0] * inv_cnt
    var = tot[1] * inv_cnt - mean * mean
    rstd = jax.lax.rsqrt(jnp.maximum(var, 0.0) + eps)
    return jnp.stack([mean, rstd], axis=0)               # (2, C)


def wrn_basic_block(x_ncl, params, *, stride, eps=1e-5, use_bn=None):
    """Pallas forward pass of WRNBasicBlock (training-mode batch statistics).

    params:
      w1: list of 3 (Cin, Cout) conv1 tap matrices (tap k multiplies row j*stride+k-1)
      w2: list of 3 (Cout, Cout) conv2 tap matrices
      ws: (Cin, Cout) 1x1 projection-shortcut matrix (ignored for identity shortcut)
      g1,b1: (Cin,) bn1 affine;  g2,b2: (Cout,) bn2 affine
    """
    # TODO(synk): nn.BatchNorm1d running_mean/running_var buffer updates (a
    # training-time side effect) are not emitted; only the forward output is.
    if use_bn is None:
        use_bn = eps > 0.0          # mirrors `if self.batchnorm > 0.0` in the module
    assert stride in (1, 2), "WRNBasicBlock only uses stride 1 or 2"

    N, Cin, L = x_ncl.shape
    Cout = params["w1"][0].shape[1]
    identity_sc = (Cin == Cout) and (stride == 1)
    L1 = (L + 2 - 3) // stride + 1          # conv1 / shortcut output length
    Cp = _round_up(Cin, 128)                # lane-dense padded channel widths
    Cq = _round_up(Cout, 128)
    vmem_limit = _vmem_limit_bytes()

    # ---- batch blocking: push toward >=512 matmul rows per grid step; block row
    #      counts divisible by the f32 (8) / bf16 (16) sublane tiling; soft cap on
    #      per-operand block bytes so blocks stay comfortably inside VMEM. ----
    mdiv = _lcm(8 // math.gcd(8, L), 16 // math.gcd(16, L1))
    target_b = -(-512 // L1)                                              # ceil
    cap_b = max(1, (2 * 1024 * 1024) // (4 * max(Cp, Cq) * max(L, L1)))
    B = _round_up(max(1, min(target_b, cap_b, N)), mdiv)
    Np = _round_up(N, B)
    nb = Np // B
    R0 = B * L                      # conv1-input rows per grid step (stride-1 space)
    R1 = B * L1                     # conv1-output / conv2 rows per grid step

    # ---- wrapper-side layout glue (cheap): NCL -> lane-dense 2-D (rows, C) f32 ----
    x_cl = jnp.transpose(x_ncl.astype(jnp.float32), (0, 2, 1))          # (N, L, Cin)
    x_cl = jnp.pad(x_cl, ((0, Np - N), (0, 0), (0, Cp - Cin)))          # (Np, L, Cp)
    x2d = x_cl.reshape(Np * L, Cp)

    if stride == 2:
        # Deinterleave rows once in the wrapper so the kernel never strides.
        x_even = x_cl[:, 0::2, :]                                       # (Np, L1, Cp)
        x_odd = x_cl[:, 1::2, :]                                        # (Np, L//2, Cp)
        if x_odd.shape[1] < L1:                                         # odd L
            x_odd = jnp.pad(x_odd, ((0, 0), (0, L1 - x_odd.shape[1]), (0, 0)))
        xe2d = x_even.reshape(Np * L1, Cp)
        xo2d = x_odd.reshape(Np * L1, Cp)

    def pad_w(w, rows, cols):       # zero-pad + bf16 cast for the MXU
        w = w.astype(jnp.float32)
        return jnp.pad(w, ((0, rows - w.shape[0]),
                           (0, cols - w.shape[1]))).astype(jnp.bfloat16)

    # Stack the 3 taps along the contraction axis -> one deep-K matmul per conv.
    w1s = jnp.concatenate([pad_w(params["w1"][k], Cp, Cq) for k in range(3)], axis=0)
    w2s = jnp.concatenate([pad_w(params["w2"][k], Cq, Cq) for k in range(3)], axis=0)
    ws = None if identity_sc else pad_w(params["ws"], Cp, Cq)

    def pad_vec(v, n):
        return jnp.pad(v.astype(jnp.float32), (0, n - v.shape[0])).reshape(1, n)

    if use_bn:
        # Zero-padded gamma/beta neutralize the huge rstd of zero-padded channels.
        g1, b1 = pad_vec(params["g1"], Cp), pad_vec(params["b1"], Cp)
        g2, b2 = pad_vec(params["g2"], Cq), pad_vec(params["b2"], Cq)
    else:
        # BN disabled: run the same fused kernels with an exact identity affine.
        g1, b1 = jnp.ones((1, Cp), jnp.float32), jnp.zeros((1, Cp), jnp.float32)
        g2, b2 = jnp.ones((1, Cq), jnp.float32), jnp.zeros((1, Cq), jnp.float32)

    # ---- per-sample boundary masks (constant per block, tiny (rows, 1) inputs) ----
    def row_masks(period, rows):
        r = np.arange(rows) % period
        nf = (r != 0).astype(np.float32).reshape(rows, 1)            # not first row
        nl = (r != period - 1).astype(np.float32).reshape(rows, 1)   # not last row
        return jnp.asarray(nf), jnp.asarray(nl)

    mnf2, mnl2 = row_masks(L1, R1)
    if stride == 1:
        mnf1, mnl1 = row_masks(L, R0)
        movd = None
    else:
        mnf1, _ = row_masks(L1, R1)              # "previous odd row exists" mask
        if L % 2 == 1:                           # odd L: padded odd row acts as conv pad
            movd = jnp.asarray(
                (np.arange(R1) % L1 < (L // 2)).astype(np.float32).reshape(R1, 1))
        else:
            movd = None
    # rows belonging to real (non batch-padding) samples -- only used for BN2 stats
    bvalid = jnp.asarray(
        (np.arange(Np * L1) // L1 < N).astype(np.float32).reshape(Np * L1, 1))

    inv_cnt1 = 1.0 / float(N * L)
    inv_cnt2 = 1.0 / float(N * L1)

    # =================== kernel 1: BN1 per-block partial stats ===================
    if use_bn:
        def stats1_kernel(x_ref, o_ref):
            x = x_ref[...]                                   # (R0, Cp) f32
            s = jnp.sum(x, axis=0, keepdims=True)
            ss = jnp.sum(x * x, axis=0, keepdims=True)
            o_ref[0, :, :] = jnp.concatenate([s, ss], axis=0)

        st1_part = pl.pallas_call(
            stats1_kernel,
            grid=(nb,),
            in_specs=[pl.BlockSpec((R0, Cp), lambda n: (n, 0))],
            out_specs=pl.BlockSpec((1, 2, Cp), lambda n: (n, 0, 0)),
            out_shape=jax.ShapeDtypeStruct((nb, 2, Cp), jnp.float32),
            compiler_params=pltpu.CompilerParams(
                dimension_semantics=("parallel",),
                vmem_limit_bytes=vmem_limit),
        )(x2d)
        stats1 = _finalize_stats(st1_part, inv_cnt1, eps)    # tiny wrapper reduce
    else:
        stats1 = jnp.concatenate([jnp.zeros((1, Cp), jnp.float32),
                                  jnp.ones((1, Cp), jnp.float32)], axis=0)

    # ===== kernel 2: bn1+relu, conv1 (one deep-K bf16 matmul per batch block), =====
    # =====           projection shortcut, per-block partial BN2 stats         =====
    def conv1_kernel(*refs):
        it = iter(refs)
        if stride == 1:
            x_ref = next(it)
        else:
            xe_ref, xo_ref = next(it), next(it)
        w1_ref = next(it)
        ws_ref = None if identity_sc else next(it)
        st1_ref, g1_ref, b1_ref = next(it), next(it), next(it)
        if stride == 1:
            mnf_ref, mnl_ref = next(it), next(it)
        else:
            mnf_ref = next(it)
            movd_ref = next(it) if (L % 2 == 1) else None
        bval_ref = next(it)
        y1_ref = next(it)
        sc_ref = None if identity_sc else next(it)
        st2_ref = next(it)

        def bn1_relu(x):
            h = (x - st1_ref[0:1, :]) * st1_ref[1:2, :] * g1_ref[...] + b1_ref[...]
            return jnp.maximum(h, 0.0)

        if stride == 1:
            h = bn1_relu(x_ref[...])                             # (R0, Cp) f32
            zrow = jnp.zeros((1, Cp), jnp.float32)
            hpad = jnp.concatenate([zrow, h, zrow], axis=0)      # (R0+2, Cp)
            tap0 = hpad[0:R0, :] * mnf_ref[...]                  # row j-1 (pad at j=0)
            tap1 = h                                             # row j
            tap2 = hpad[2:R0 + 2, :] * mnl_ref[...]              # row j+1 (pad at j=L-1)
            sc_rows = h                                          # 1x1 stride-1 shortcut
        else:
            he = bn1_relu(xe_ref[...])                           # rows 2j    (R1, Cp)
            ho = bn1_relu(xo_ref[...])                           # rows 2j+1  (R1, Cp)
            zrow = jnp.zeros((1, Cp), jnp.float32)
            tap0 = jnp.concatenate([zrow, ho[:R1 - 1, :]], axis=0) * mnf_ref[...]  # 2j-1
            tap1 = he                                            # row 2j
            tap2 = ho if movd_ref is None else ho * movd_ref[...]  # row 2j+1
            sc_rows = he                                         # 1x1 stride-2 shortcut

        im2col = jnp.concatenate([tap0.astype(jnp.bfloat16),
                                  tap1.astype(jnp.bfloat16),
                                  tap2.astype(jnp.bfloat16)], axis=1)   # (R1, 3*Cp)
        y1 = jnp.dot(im2col, w1_ref[...], preferred_element_type=jnp.float32)
        y1_ref[...] = y1.astype(jnp.bfloat16)

        if not identity_sc:
            sc_ref[...] = jnp.dot(sc_rows.astype(jnp.bfloat16), ws_ref[...],
                                  preferred_element_type=jnp.float32).astype(jnp.bfloat16)

        # per-block partial (sum, sumsq) of the f32 y1; batch-padding rows masked out
        y1m = y1 * bval_ref[...]
        s = jnp.sum(y1m, axis=0, keepdims=True)
        ss = jnp.sum(y1m * y1m, axis=0, keepdims=True)
        st2_ref[0, :, :] = jnp.concatenate([s, ss], axis=0)

    in_specs2, inputs2 = [], []

    def add_in(arr, spec):
        in_specs2.append(spec)
        inputs2.append(arr)

    if stride == 1:
        add_in(x2d, pl.BlockSpec((R0, Cp), lambda n: (n, 0)))
    else:
        add_in(xe2d, pl.BlockSpec((R1, Cp), lambda n: (n, 0)))
        add_in(xo2d, pl.BlockSpec((R1, Cp), lambda n: (n, 0)))
    # Grid-invariant operands (weights / stats / affine / masks) use constant index
    # maps; they could additionally be single-buffered via pipeline_mode=pl.Buffered(1).
    add_in(w1s, pl.BlockSpec((3 * Cp, Cq), lambda n: (0, 0)))
    if not identity_sc:
        add_in(ws, pl.BlockSpec((Cp, Cq), lambda n: (0, 0)))
    add_in(stats1, pl.BlockSpec((2, Cp), lambda n: (0, 0)))
    add_in(g1, pl.BlockSpec((1, Cp), lambda n: (0, 0)))
    add_in(b1, pl.BlockSpec((1, Cp), lambda n: (0, 0)))
    if stride == 1:
        add_in(mnf1, pl.BlockSpec((R0, 1), lambda n: (0, 0)))
        add_in(mnl1, pl.BlockSpec((R0, 1), lambda n: (0, 0)))
    else:
        add_in(mnf1, pl.BlockSpec((R1, 1), lambda n: (0, 0)))
        if L % 2 == 1:
            add_in(movd, pl.BlockSpec((R1, 1), lambda n: (0, 0)))
    add_in(bvalid, pl.BlockSpec((R1, 1), lambda n: (n, 0)))

    out_shapes2 = [jax.ShapeDtypeStruct((Np * L1, Cq), jnp.bfloat16)]
    out_specs2 = [pl.BlockSpec((R1, Cq), lambda n: (n, 0))]
    if not identity_sc:
        out_shapes2.append(jax.ShapeDtypeStruct((Np * L1, Cq), jnp.bfloat16))
        out_specs2.append(pl.BlockSpec((R1, Cq), lambda n: (n, 0)))
    out_shapes2.append(jax.ShapeDtypeStruct((nb, 2, Cq), jnp.float32))
    out_specs2.append(pl.BlockSpec((1, 2, Cq), lambda n: (n, 0, 0)))

    res2 = pl.pallas_call(
        conv1_kernel,
        grid=(nb,),
        in_specs=in_specs2,
        out_specs=tuple(out_specs2),
        out_shape=tuple(out_shapes2),
        compiler_params=pltpu.CompilerParams(
            dimension_semantics=("parallel",),
            vmem_limit_bytes=vmem_limit),
    )(*inputs2)

    if identity_sc:
        y1, st2_part = res2
        sc = x2d                        # identity shortcut adds the ORIGINAL input (f32)
    else:
        y1, sc, st2_part = res2

    if use_bn:
        stats2 = _finalize_stats(st2_part, inv_cnt2, eps)
    else:
        stats2 = jnp.concatenate([jnp.zeros((1, Cq), jnp.float32),
                                  jnp.ones((1, Cq), jnp.float32)], axis=0)

    # ======= kernel 3: bn2+relu, conv2 (deep-K bf16 matmul), residual add =======
    def conv2_kernel(y1_ref, sc_ref, w2_ref, st2_ref, g2_ref, b2_ref,
                     mnf_ref, mnl_ref, o_ref):
        y1b = y1_ref[...].astype(jnp.float32)                    # (R1, Cq)
        h2 = (y1b - st2_ref[0:1, :]) * st2_ref[1:2, :] * g2_ref[...] + b2_ref[...]
        h2 = jnp.maximum(h2, 0.0)
        zrow = jnp.zeros((1, Cq), jnp.float32)
        hpad = jnp.concatenate([zrow, h2, zrow], axis=0)
        tap0 = hpad[0:R1, :] * mnf_ref[...]
        tap2 = hpad[2:R1 + 2, :] * mnl_ref[...]
        im2col = jnp.concatenate([tap0.astype(jnp.bfloat16),
                                  h2.astype(jnp.bfloat16),
                                  tap2.astype(jnp.bfloat16)], axis=1)   # (R1, 3*Cq)
        y2 = jnp.dot(im2col, w2_ref[...], preferred_element_type=jnp.float32)
        o_ref[...] = sc_ref[...].astype(jnp.float32) + y2

    out2d = pl.pallas_call(
        conv2_kernel,
        grid=(nb,),
        in_specs=[
            pl.BlockSpec((R1, Cq), lambda n: (n, 0)),      # y1 (bf16)
            pl.BlockSpec((R1, Cq), lambda n: (n, 0)),      # shortcut term
            pl.BlockSpec((3 * Cq, Cq), lambda n: (0, 0)),  # stacked conv2 weights
            pl.BlockSpec((2, Cq), lambda n: (0, 0)),       # bn2 (mean, rstd)
            pl.BlockSpec((1, Cq), lambda n: (0, 0)),       # gamma2
            pl.BlockSpec((1, Cq), lambda n: (0, 0)),       # beta2
            pl.BlockSpec((R1, 1), lambda n: (0, 0)),       # not-first-row mask
            pl.BlockSpec((R1, 1), lambda n: (0, 0)),       # not-last-row mask
        ],
        out_specs=pl.BlockSpec((R1, Cq), lambda n: (n, 0)),
        out_shape=jax.ShapeDtypeStruct((Np * L1, Cq), jnp.float32),
        compiler_params=pltpu.CompilerParams(
            dimension_semantics=("parallel",),
            vmem_limit_bytes=vmem_limit),
    )(y1, sc, w2s, stats2, g2, b2, mnf2, mnl2)

    # ---- strip batch/channel padding, back to PyTorch NCL layout ----
    out = out2d.reshape(Np, L1, Cq)[:N, :, :Cout]
    return jnp.transpose(out, (0, 2, 1))


def wrn_block_ref(x_ncl, params, stride, eps):
    """Pure-JAX reference mirroring WRNBasicBlock.forward (training-mode BN)."""
    Cin = x_ncl.shape[1]
    Cout = params["w1"][0].shape[1]
    use_shortcut = (Cin == Cout) and (stride == 1)
    use_bn = eps > 0.0

    def bn(x, g, b):
        mu = x.mean(axis=(0, 2), keepdims=True)
        var = ((x - mu) ** 2).mean(axis=(0, 2), keepdims=True)
        return (x - mu) * jax.lax.rsqrt(var + eps) * g[None, :, None] + b[None, :, None]

    def conv(x, w_list, s, pad):
        w = jnp.transpose(jnp.stack(w_list, 0), (2, 1, 0))  # (K, I, O) -> (O, I, K)
        return jax.lax.conv_general_dilated(
            x, w, (s,), [(pad, pad)], dimension_numbers=("NCH", "OIH", "NCH"))

    h = bn(x_ncl, params["g1"], params["b1"]) if use_bn else x_ncl
    h = jax.nn.relu(h)
    y1 = conv(h, params["w1"], stride, 1)
    y1 = bn(y1, params["g2"], params["b2"]) if use_bn else y1
    h2 = jax.nn.relu(y1)
    y2 = conv(h2, params["w2"], 1, 1)
    sc = x_ncl if use_shortcut else conv(h, [params["ws"]], stride, 0)
    return sc + y2


if __name__ == "__main__":
    key = jax.random.PRNGKey(0)
    eps = 1e-5
    # (N, Cin, Cout, L, stride): projection-shortcut case and identity-shortcut case
    for (N, Cin, Cout, L, stride) in [(2, 8, 16, 16, 2), (2, 16, 16, 16, 1)]:
        key, *ks = jax.random.split(key, 13)
        x = jax.random.normal(ks[0], (N, Cin, L), jnp.float32)
        w1 = [0.2 * jax.random.normal(ks[1 + k], (Cin, Cout), jnp.float32) for k in range(3)]
        w2 = [0.2 * jax.random.normal(ks[4 + k], (Cout, Cout), jnp.float32) for k in range(3)]
        ws = 0.2 * jax.random.normal(ks[7], (Cin, Cout), jnp.float32)
        g1 = 1.0 + 0.1 * jax.random.normal(ks[8], (Cin,), jnp.float32)
        b1 = 0.1 * jax.random.normal(ks[9], (Cin,), jnp.float32)
        g2 = 1.0 + 0.1 * jax.random.normal(ks[10], (Cout,), jnp.float32)
        b2 = 0.1 * jax.random.normal(ks[11], (Cout,), jnp.float32)
        params = dict(w1=w1, w2=w2, ws=ws, g1=g1, b1=b1, g2=g2, b2=b2)

        out = jax.block_until_ready(wrn_basic_block(x, params, stride=stride, eps=eps))
        ref = wrn_block_ref(x, params, stride, eps)
        # bf16 MXU operands and bf16 inter-kernel intermediates (f32 accumulation).
        np.testing.assert_allclose(np.asarray(out), np.asarray(ref),
                                   rtol=2e-2, atol=2e-2)

    print("KERNEL_OK")
</pallas_src>

<mosaic_0001>
module attributes {stable_mosaic.version = 11 : i64} {
  func.func @stats1_kernel(%arg0: i32, %arg1: memref<32x128xf32, #tpu.memory_space<vmem>>, %arg2: memref<1x2x128xf32, #tpu.memory_space<vmem>>) attributes {dimension_semantics = [#tpu.dimension_semantics<parallel>], iteration_bounds = array<i64: 1>, scalar_prefetch = 0 : i64, scratch_operands = 0 : i64, tpu.core_type = #tpu.core_type<tc>, window_params = [{transform_indices = @transform_0, window_bounds = array<i64: 32, 128>}, {transform_indices = @transform_1, window_bounds = array<i64: 1, 2, 128>}]} {
    %c0 = arith.constant 0 : index
    %c0_0 = arith.constant 0 : index
    %0 = vector.load %arg1[%c0, %c0_0] : memref<32x128xf32, #tpu.memory_space<vmem>>, vector<32x128xf32>
    %cst = arith.constant dense<0.000000e+00> : vector<128xf32>
    %1 = vector.multi_reduction <add>, %0, %cst [0] : vector<32x128xf32> to vector<128xf32>
    %2 = vector.shape_cast %1 : vector<128xf32> to vector<1x128xf32>
    %3 = arith.mulf %0, %0 : vector<32x128xf32>
    %cst_1 = arith.constant dense<0.000000e+00> : vector<128xf32>
    %4 = vector.multi_reduction <add>, %3, %cst_1 [0] : vector<32x128xf32> to vector<128xf32>
    %5 = vector.shape_cast %4 : vector<128xf32> to vector<1x128xf32>
    %6 = tpu.concatenate %2, %5 in 0 : vector<1x128xf32>, vector<1x128xf32> -> vector<2x128xf32>
    %c0_2 = arith.constant 0 : index
    %c0_3 = arith.constant 0 : index
    %c0_4 = arith.constant 0 : index
    %7 = vector.load %arg2[%c0_2, %c0_3, %c0_4] : memref<1x2x128xf32, #tpu.memory_space<vmem>>, vector<1x2x128xf32>
    %8 = vector.shape_cast %7 : vector<1x2x128xf32> to vector<2x128xf32>
    %9 = vector.shape_cast %6 : vector<2x128xf32> to vector<1x2x128xf32>
    tpu.vector_store %arg2[%c0_2, %c0_3, %c0_4], %9 {strides = array<i32>} : memref<1x2x128xf32, #tpu.memory_space<vmem>>, vector<1x2x128xf32>,
    return
  }
  func.func @transform_0(%arg0: i32) -> (i32, i32) {
    %c0_i32 = arith.constant 0 : i32
    %c0_i32_0 = arith.constant 0 : i32
    return %arg0, %c0_i32 : i32, i32
  }
  func.func @transform_1(%arg0: i32) -> (i32, i32, i32) {
    %c0_i32 = arith.constant 0 : i32
    %c0_i32_0 = arith.constant 0 : i32
    %c0_i32_1 = arith.constant 0 : i32
    return %arg0, %c0_i32, %c0_i32_0 : i32, i32, i32
  }
}

</mosaic_0001>

<llo_original>
// kernel: tpu_custom_call.1
$region0: #{tpu_custom_call.1}
  #allocation0 [shape = 'u32[]', space=smem, size = 0x4, offset = 0x4, fixed_abs, tag = 'smem constant byte address 0x4 - core index']
  #allocation1 [shape = 'u32[144,128]{1,0:T(1,128)}', space=vmem, size = 0x12000, scoped, tag = 'internal scratch']
  %s0 = inlined_call_operand.hbm [shape: f32[32,128], index: 0, kind: input, shape index: {}]
  %s1 = inlined_call_operand.hbm [shape: f32[1,2,128], index: 1, kind: output, shape index: {}]
  %s2 = sld [smem:[#allocation0]]
  $region18: #{tpu_custom_call.1} parent=0
    _
  %s4 = ssub.s32 1, %s2
  %s5 = scalar_select 0, %s4, %s2
  $region1: #{tpu_custom_call.1} parent=0
    #allocation2 [shape = 'u8[16384]{0}', space=vmem, size = 0x4000, scoped, tag = 'input window, operand 0, single buffered']
    #allocation3 [shape = 's32[1]{0}', space=sflag, size = 0x4, scoped, tag = 'scoped memory for tpu_custom_call.1']
    #allocation4 [shape = 's32[1]{0}', space=sflag, size = 0x4, scoped, tag = 'scoped memory for tpu_custom_call.1']
    #allocation5 [shape = 'u8[1024]{0}', space=vmem, size = 0x400, scoped, tag = 'output window, operand 0, single buffered']
    %6 = vsyncpa [#allocation3], 0
    %7 = vsyncpa [#allocation4], 0
    // Predicated region
    $region2: #{tpu_custom_call.1} parent=1 // pred_check
      _
    $region3: #{tpu_custom_call.1} parent=1 // pred_check_branch
      %9 = sbr.rel (0) target = $region5
    $region4: #{tpu_custom_call.1} parent=1 // pred_region
      %s11 = ssub.s32 512, 512
      %12 = vsyncadd [#allocation3], %s11
      %s13 = sshll.u32 [#allocation2], 4
      %s14 = int_to_ptr.vmem [resolvable:$true] %s13
      %19 = dma.hbm_to_vmem [thread:$0]  %s0, 512, %s14, [#allocation3], 128, 128, 8
    $region5: #{tpu_custom_call.1} parent=1 // pred_fallthru
      _
    // Predicated region
    $region6: #{tpu_custom_call.1} parent=1 // pred_check
      _
    $region7: #{tpu_custom_call.1} parent=1 // pred_check_branch
      %21 = sbr.rel (0) target = $region9
    $region8: #{tpu_custom_call.1} parent=1 // pred_region
      %22 = dma.done [#allocation3], 512
    $region9: #{tpu_custom_call.1} parent=1 // pred_fallthru
      _
    %v23 = vld [vmem:[#allocation2] sm:$0xff]
    %v24 = vld [vmem:[#allocation2 + $0x8] sm:$0xff]
    %v25 = vld [vmem:[#allocation2 + $0x10] sm:$0xff]
    %v26 = vld [vmem:[#allocation2 + $0x18] sm:$0xff]
    %v27 = vadd.f32 %v23, %v24
    %v28 = vadd.f32 %v27, %v25
    %v29 = vadd.f32 %v28, %v26
    %v30 = vrot.slane %v29, 4
    %v31 = vadd.f32 %v29, %v30
    %v32 = vrot.slane %v31, 2
    %v33 = vadd.f32 %v31, %v32
    %v34 = vrot.slane %v33, 1
    %v35 = vadd.f32 %v33, %v34
    %v36 = vmul.f32 %v23, %v23
    %v37 = vmul.f32 %v24, %v24
    %v38 = vmul.f32 %v25, %v25
    %v39 = vmul.f32 %v26, %v26
    %v40 = vadd.f32 %v36, %v37
    %v41 = vadd.f32 %v40, %v38
    %v42 = vadd.f32 %v41, %v39
    %v43 = vrot.slane %v42, 4
    %v44 = vadd.f32 %v42, %v43
    %v45 = vrot.slane %v44, 2
    %v46 = vadd.f32 %v44, %v45
    %v47 = vrot.slane %v46, 1
    %v48 = vadd.f32 %v46, %v47
    %vm49 = vcmask 1040384
    %v50 = vsel %vm49, %v35, %v48
    %51 = vst [vmem:[#allocation5] sm:$0x3] %v50
    // Predicated region
    $region10: #{tpu_custom_call.1} parent=1 // pred_check
      _
    $region11: #{tpu_custom_call.1} parent=1 // pred_check_branch
      %53 = sbr.rel (0) target = $region13
    $region12: #{tpu_custom_call.1} parent=1 // pred_region
      %s55 = ssub.s32 32, 32
      %56 = vsyncadd [#allocation4], %s55
      %s58 = sshll.u32 [#allocation5], 4
      %s59 = int_to_ptr.vmem [resolvable:$true] %s58
      %61 = dma.vmem_to_hbm [thread:$0]  %s59, 32, %s1, [#allocation4]
    $region13: #{tpu_custom_call.1} parent=1 // pred_fallthru
      _
    // Predicated region
    $region14: #{tpu_custom_call.1} parent=1 // pred_check
      _
    $region15: #{tpu_custom_call.1} parent=1 // pred_check_branch
      %63 = sbr.rel (0) target = $region17
    $region16: #{tpu_custom_call.1} parent=1 // pred_region
      %64 = dma.done [#allocation4], 32
    $region17: #{tpu_custom_call.1} parent=1 // pred_fallthru
      _
    %65 = vsyncpa [#allocation3], 1
    %66 = vsyncpa [#allocation4], 1

</llo_original>
